<compile_context>
chip_gen: v7x
topology: tpu7x:2x2x1
jax: 0.10.0
libtpu: 0.0.40
codegen_flags: <defaults>
</compile_context>

<pallas_src>
import jax
import jax.numpy as jnp
from jax.experimental import pallas as pl
from jax.experimental.pallas import tpu as pltpu


def _fused_kernel(x_ref, o_ref):
    x = x_ref[...]
    a1 = x + x                      # 2*x
    # dropout(p=0.0, training=True) is the identity -> a2 == a1
    # TODO(synk): if p ever becomes nonzero, add a pltpu.prng_seed /
    # prng_random_bits mask-and-rescale path instead of this identity.
    o_ref[...] = a1 * a1 + a1       # a3 + a2


# Inputs at or below this size go through the no-grid whole-array path.
_SMALL_BYTES = 256 * 1024


def _whole_array_call(x):
    """No-grid path: whole array lives in VMEM for the call. No reshapes."""
    return pl.pallas_call(
        _fused_kernel,
        out_shape=jax.ShapeDtypeStruct(x.shape, x.dtype),
        in_specs=[pl.BlockSpec(memory_space=pltpu.MemorySpace.VMEM)],
        out_specs=pl.BlockSpec(memory_space=pltpu.MemorySpace.VMEM),
        input_output_aliases={0: 0},
    )(x)


def _tiled_call(x2):
    """Gridded path for large 2D (rows, cols) inputs, cols % 128 == 0."""
    rows, cols = x2.shape
    itemsize = jnp.dtype(x2.dtype).itemsize
    row_bytes = cols * itemsize

    # ~1 MiB per block: 2 arrays x 2 pipeline buffers x 1 MiB = 4 MiB of
    # VMEM -> safe on v5e (16 MiB scoped default), v6e (32 MiB) and
    # v7x (64 MiB physical / 32 MiB scoped).
    target_block_bytes = 1 << 20
    blk = max(8, min(rows, target_block_bytes // row_bytes))
    blk = (blk // 8) * 8            # sublane multiple (8, 128) constraint
    grid = (pl.cdiv(rows, blk),)

    return pl.pallas_call(
        _fused_kernel,
        out_shape=jax.ShapeDtypeStruct(x2.shape, x2.dtype),
        grid=grid,
        in_specs=[pl.BlockSpec((blk, cols), lambda i: (i, 0))],
        out_specs=pl.BlockSpec((blk, cols), lambda i: (i, 0)),
        input_output_aliases={0: 0},
        compiler_params=pltpu.CompilerParams(
            dimension_semantics=("parallel",)),
    )(x2)


def model_forward(x):
    """Fused forward of the PyTorch module. Accepts any shape/dtype."""
    orig_shape = x.shape
    n = x.size
    nbytes = n * jnp.dtype(x.dtype).itemsize

    # Small inputs (incl. the module's (16, 8)): no reshape, no grid.
    if nbytes <= _SMALL_BYTES:
        return _whole_array_call(x)

    # Large inputs: present a lane-dense 2D slab and tile it.
    if x.ndim >= 2 and x.shape[-1] % 128 == 0:
        x2 = x.reshape(-1, x.shape[-1])        # keep existing lane-dense last dim
        return _tiled_call(x2).reshape(orig_shape)
    if n % 1024 == 0:
        x2 = x.reshape(n // 1024, 1024)        # wide rows: long unmasked vst runs
        return _tiled_call(x2).reshape(orig_shape)
    if n % 128 == 0:
        x2 = x.reshape(n // 128, 128)
        return _tiled_call(x2).reshape(orig_shape)

    # TODO(synk): large input whose element count is not a multiple of 128;
    # needs a padded/masked tiled path. Fall back to whole-array (may hit
    # the scoped VMEM limit for very large tensors).
    return _whole_array_call(x)


if __name__ == "__main__":
    key = jax.random.PRNGKey(0)
    x1 = jax.random.normal(key, (16, 8), dtype=jnp.float32)

    # Pure-JAX reference of the PyTorch module's forward (computed first so
    # the aliased/donated input buffer question never affects correctness).
    a1 = x1 + x1
    ref = a1 + a1 * a1

    out = model_forward(x1)
    jax.block_until_ready(out)

    assert out.shape == x1.shape
    assert jnp.allclose(out, ref, atol=1e-6), "mismatch vs reference"

    print("KERNEL_OK")
</pallas_src>

<mosaic_0001>
module attributes {stable_mosaic.version = 11 : i64} {
  func.func @_fused_kernel(%arg0: memref<16x8xf32, #tpu.memory_space<vmem>>, %arg1: memref<16x8xf32, #tpu.memory_space<vmem>>) attributes {dimension_semantics = [], scalar_prefetch = 0 : i64, scratch_operands = 0 : i64, tpu.core_type = #tpu.core_type<tc>} {
    %c0 = arith.constant 0 : index
    %c0_0 = arith.constant 0 : index
    %0 = vector.load %arg0[%c0, %c0_0] : memref<16x8xf32, #tpu.memory_space<vmem>>, vector<16x8xf32>
    %1 = arith.addf %0, %0 : vector<16x8xf32>
    %2 = arith.mulf %1, %1 : vector<16x8xf32>
    %3 = arith.addf %2, %1 : vector<16x8xf32>
    %c0_1 = arith.constant 0 : index
    %c0_2 = arith.constant 0 : index
    %4 = vector.load %arg1[%c0_1, %c0_2] : memref<16x8xf32, #tpu.memory_space<vmem>>, vector<16x8xf32>
    tpu.vector_store %arg1[%c0_1, %c0_2], %3 {strides = array<i32>} : memref<16x8xf32, #tpu.memory_space<vmem>>, vector<16x8xf32>,
    return
  }
}

</mosaic_0001>

<llo_original>
// kernel: tpu_custom_call.1
$region0: #{tpu_custom_call.1}
  #allocation0 [shape = 'u32[]', space=smem, size = 0x4, offset = 0x4, fixed_abs, tag = 'smem constant byte address 0x4 - core index']
  #allocation1 [shape = 'u32[144,128]{1,0:T(1,128)}', space=vmem, size = 0x12000, scoped, tag = 'internal scratch']
  %s0 = inlined_call_operand.vmem [shape: f32[16,8], index: 0, kind: input, shape index: {}, may-alias: {0,1}]
  %s1 = inlined_call_operand.vmem [shape: f32[16,8], index: 1, kind: output, shape index: {}, may-alias: {0,1}]
  %s2 = sld [smem:[#allocation0]]
  $region14: #{tpu_custom_call.1} parent=0
    _
  %s4 = ssub.s32 1, %s2
  %s5 = scalar_select 0, %s4, %s2
  // Predicated region
  $region2: #{tpu_custom_call.1} parent=0 // pred_check
    _
  $region3: #{tpu_custom_call.1} parent=0 // pred_check_branch
    %7 = sbr.rel (0) target = $region5
  $region4: #{tpu_custom_call.1} parent=0 // pred_region
    _
  $region5: #{tpu_custom_call.1} parent=0 // pred_fallthru
    _
  %v8 = vld [vmem:[%s0] sm:$0xff]
  %v9 = vld [vmem:[%s0 + $0x8] sm:$0xff]
  %v10 = vadd.f32 %v8, %v8
  %v11 = vadd.f32 %v9, %v9
  %v12 = vmul.f32 %v10, %v10
  %v13 = vmul.f32 %v11, %v11
  %v14 = vadd.f32 %v12, %v10
  %v15 = vadd.f32 %v13, %v11
  %vm16 = vcmask 64512
  %17 = vst.msk [vmem:[%s1] sm:$0xff] %vm16, %v14
  %18 = vst.msk [vmem:[%s1 + $0x8] sm:$0xff] %vm16, %v15
  // Predicated region
  $region6: #{tpu_custom_call.1} parent=0 // pred_check
    _
  $region7: #{tpu_custom_call.1} parent=0 // pred_check_branch
    %20 = sbr.rel (0) target = $region9
  $region8: #{tpu_custom_call.1} parent=0 // pred_region
    _
  $region9: #{tpu_custom_call.1} parent=0 // pred_fallthru
    _
  // Predicated region
  $region10: #{tpu_custom_call.1} parent=0 // pred_check
    _
  $region11: #{tpu_custom_call.1} parent=0 // pred_check_branch
    %22 = sbr.rel (0) target = $region13
  $region12: #{tpu_custom_call.1} parent=0 // pred_region
    _
  $region13: #{tpu_custom_call.1} parent=0 // pred_fallthru
    _

</llo_original>
